<compile_context>
chip_gen: v6e
topology: v6e:2x2x1
jax: 0.10.0
libtpu: 0.0.40
codegen_flags: <defaults>
</compile_context>

<pallas_src>
import functools

import jax
import jax.numpy as jnp
from jax.experimental import pallas as pl
from jax.experimental.pallas import tpu as pltpu

_HIDDEN = 32


def _round_up(n, m):
    return ((n + m - 1) // m) * m


def init_params(key, state_dim, num_output, hidden=_HIDDEN):
    """torch.nn.Linear default init, torch weight convention W: (out, in)."""
    keys = jax.random.split(key, 6)

    def linear(kw, kb, fan_in, fan_out):
        bound = 1.0 / (fan_in ** 0.5)
        w = jax.random.uniform(kw, (fan_out, fan_in), jnp.float32, -bound, bound)
        b = jax.random.uniform(kb, (fan_out,), jnp.float32, -bound, bound)
        return w, b

    w1, b1 = linear(keys[0], keys[1], state_dim, hidden)
    w2, b2 = linear(keys[2], keys[3], hidden, hidden)
    w3, b3 = linear(keys[4], keys[5], state_dim and hidden, num_output)
    return w1, b1, w2, b2, w3, b3


def pack_params(w1, b1, w2, b2, w3, b3, hidden=_HIDDEN):
    """Pack all weights AND biases into one buffer (single parameter DMA).

    Row layout:  [0:H) -> layer 1, [H:2H) -> layer 2, [2H:2H+out_pad) -> layer 3.
    Col layout:  [0:cols) -> weight columns (zero padded), col `cols` -> bias.
    Unused rows/cols are zero so the kernel math is unchanged.
    """
    state_dim = w1.shape[1]
    num_output = w3.shape[0]
    sd_pad = _round_up(state_dim, 8)
    out_pad = _round_up(num_output, 8)
    cols = max(sd_pad, hidden)
    rows = 2 * hidden + out_pad

    w = jnp.zeros((rows, cols + 1), jnp.float32)
    w = w.at[0:hidden, 0:state_dim].set(w1)
    w = w.at[hidden:2 * hidden, 0:hidden].set(w2)
    w = w.at[2 * hidden:2 * hidden + num_output, 0:hidden].set(w3)
    # Biases live in the last column.
    w = w.at[0:hidden, cols].set(b1)
    w = w.at[hidden:2 * hidden, cols].set(b2)
    w = w.at[2 * hidden:2 * hidden + num_output, cols].set(b3)
    return w


def _mlp_kernel(w_ref, x_ref, o_ref, *, hidden, sd_pad, out_pad, bias_col):
    xv = x_ref[...]                                                  # (sd_pad, tile)
    h2r = 2 * hidden
    bc = bias_col

    # Layer 1: Linear(state_dim, 32) + ReLU      (padded W cols are zero)
    h1 = jnp.dot(w_ref[0:hidden, 0:sd_pad], xv,
                 preferred_element_type=jnp.float32)                 # (32, tile)
    h1 = jnp.maximum(h1 + w_ref[0:hidden, bc:bc + 1], 0.0)

    # Layer 2: Linear(32, 32) + ReLU
    h2 = jnp.dot(w_ref[hidden:h2r, 0:hidden], h1,
                 preferred_element_type=jnp.float32)                 # (32, tile)
    h2 = jnp.maximum(h2 + w_ref[hidden:h2r, bc:bc + 1], 0.0)

    # Layer 3: Linear(32, num_output)   (rows >= num_output are zero pad)
    out = jnp.dot(w_ref[h2r:h2r + out_pad, 0:hidden], h2,
                  preferred_element_type=jnp.float32)                # (out_pad, tile)
    out = out + w_ref[h2r:h2r + out_pad, bc:bc + 1]
    o_ref[...] = out.astype(o_ref.dtype)


@functools.partial(jax.jit, static_argnames=("hidden", "tile_b"))
def mlp_forward_fb(xt, w_packed, *, hidden=_HIDDEN, tile_b=4096):
    """Fast path, no wrapper transposes.

    xt:       (sd_pad, b_pad) f32, feature-major, b_pad % 128 == 0.
    returns:  (out_pad, b_pad) f32 (padded batch columns are don't-care).
    """
    sd_pad, b_pad = xt.shape
    rows, cols_p1 = w_packed.shape
    cols = cols_p1 - 1
    out_pad = rows - 2 * hidden
    assert b_pad % 128 == 0, "batch axis must be padded to a multiple of 128"

    # Tile selection: as large as possible (DMA/step-overhead bound kernel),
    # always a multiple of 128, and >= 2 grid steps when the batch allows it
    # so the "parallel" axis can shard across v7x's two TensorCores.
    tile = min(tile_b, b_pad)
    if b_pad >= 256:
        tile = min(tile, _round_up(pl.cdiv(b_pad, 2), 128))
    tile = max(128, _round_up(tile, 128))
    grid = (pl.cdiv(b_pad, tile),)   # partial final block handled by Pallas

    kernel = functools.partial(_mlp_kernel, hidden=hidden, sd_pad=sd_pad,
                               out_pad=out_pad, bias_col=cols)

    return pl.pallas_call(
        kernel,
        out_shape=jax.ShapeDtypeStruct((out_pad, b_pad), jnp.float32),
        grid=grid,
        in_specs=[
            # Parameters: constant index map -> stays VMEM-resident across steps.
            pl.BlockSpec((rows, cols_p1), lambda i: (0, 0)),
            # Activations: tiled over batch (lane axis), double-buffered.
            pl.BlockSpec((sd_pad, tile), lambda i: (0, i)),
        ],
        out_specs=pl.BlockSpec((out_pad, tile), lambda i: (0, i)),
        compiler_params=pltpu.CompilerParams(
            dimension_semantics=("parallel",)),
    )(w_packed, xt)


@functools.partial(jax.jit, static_argnames=("num_output", "hidden", "tile_b"))
def mlp_forward(x, w_packed, *, num_output, hidden=_HIDDEN, tile_b=4096):
    """PyTorch-compatible wrapper: x (B, state_dim) -> (B, num_output).

    NOTE: the pad/transpose below is convenience only; a training loop should
    keep activations in (feature, batch) layout and call mlp_forward_fb
    directly to avoid two extra HBM passes per step.
    """
    B, state_dim = x.shape
    sd_pad = _round_up(state_dim, 8)
    b_pad = _round_up(B, 128)          # pad to lanes only, not to the tile

    xt = jnp.pad(x.T, ((0, sd_pad - state_dim), (0, b_pad - B)))
    out_t = mlp_forward_fb(xt, w_packed, hidden=hidden, tile_b=tile_b)
    return out_t[:num_output, :B].T


def reference_forward(x, w1, b1, w2, b2, w3, b3):
    """Plain-JAX reference mirroring the PyTorch forward exactly."""
    h1 = jnp.maximum(x @ w1.T + b1, 0.0)
    h2 = jnp.maximum(h1 @ w2.T + b2, 0.0)
    return h2 @ w3.T + b3


if __name__ == "__main__":
    key = jax.random.PRNGKey(0)
    k_param, k_x, k_x2 = jax.random.split(key, 3)

    # Small shapes consistent with a typical RL setup (e.g. CartPole).
    batch, state_dim, num_output = 8, 4, 2

    params = init_params(k_param, state_dim, num_output)
    w_packed = pack_params(*params)

    x = jax.random.normal(k_x, (batch, state_dim), jnp.float32)
    out = jax.block_until_ready(mlp_forward(x, w_packed, num_output=num_output))
    ref = reference_forward(x, *params)
    assert out.shape == (batch, num_output)
    assert jnp.allclose(out, ref, atol=1e-5, rtol=1e-5)

    # Larger, awkward batch: >=2 grid steps (v7x megacore sharding) and a
    # partial final block (no round-up-to-tile padding waste).
    batch2 = 300
    x2 = jax.random.normal(k_x2, (batch2, state_dim), jnp.float32)
    out2 = jax.block_until_ready(mlp_forward(x2, w_packed, num_output=num_output))
    ref2 = reference_forward(x2, *params)
    assert out2.shape == (batch2, num_output)
    assert jnp.allclose(out2, ref2, atol=1e-5, rtol=1e-5)

    print("KERNEL_OK")
</pallas_src>

<mosaic_0001>
module attributes {stable_mosaic.version = 11 : i64} {
  func.func @_mlp_kernel(%arg0: i32, %arg1: memref<72x33xf32, #tpu.memory_space<vmem>>, %arg2: memref<8x128xf32, #tpu.memory_space<vmem>>, %arg3: memref<8x128xf32, #tpu.memory_space<vmem>>) attributes {dimension_semantics = [#tpu.dimension_semantics<parallel>], iteration_bounds = array<i64: 1>, scalar_prefetch = 0 : i64, scratch_operands = 0 : i64, tpu.core_type = #tpu.core_type<tc>, window_params = [{pipeline_mode = #tpu.pipeline_mode<synchronous>, transform_indices = @transform_0, window_bounds = array<i64: 72, 33>}, {transform_indices = @transform_1, window_bounds = array<i64: 8, 128>}, {transform_indices = @transform_2, window_bounds = array<i64: 8, 128>}]} {
    %c0 = arith.constant 0 : index
    %c0_0 = arith.constant 0 : index
    %0 = vector.load %arg2[%c0, %c0_0] : memref<8x128xf32, #tpu.memory_space<vmem>>, vector<8x128xf32>
    %c0_1 = arith.constant 0 : index
    %c0_2 = arith.constant 0 : index
    %1 = vector.load %arg1[%c0_1, %c0_2] : memref<72x33xf32, #tpu.memory_space<vmem>>, vector<32x8xf32>
    %cst = arith.constant dense<0.000000e+00> : vector<32x128xf32>
    %2 = tpu.matmul %1, %0, %cst {dimension_numbers = #tpu.dot_dimension_numbers<[1], [0], [0], [1], [0, 0, 1, 1], [], []>} : vector<32x8xf32>, vector<8x128xf32>, vector<32x128xf32> -> vector<32x128xf32>
    %c0_3 = arith.constant 0 : index
    %c32 = arith.constant 32 : index
    %3 = vector.load %arg1[%c0_3, %c32] : memref<72x33xf32, #tpu.memory_space<vmem>>, vector<32x1xf32>
    %4 = vector.broadcast %3 : vector<32x1xf32> to vector<32x128xf32>
    %5 = arith.addf %2, %4 : vector<32x128xf32>
    %cst_4 = arith.constant 0.000000e+00 : f32
    %6 = vector.broadcast %cst_4 : f32 to vector<32x128xf32>
    %7 = arith.maximumf %5, %6 : vector<32x128xf32>
    %c32_5 = arith.constant 32 : index
    %c0_6 = arith.constant 0 : index
    %8 = vector.load %arg1[%c32_5, %c0_6] : memref<72x33xf32, #tpu.memory_space<vmem>>, vector<32x32xf32>
    %cst_7 = arith.constant dense<0.000000e+00> : vector<32x128xf32>
    %9 = tpu.matmul %8, %7, %cst_7 {dimension_numbers = #tpu.dot_dimension_numbers<[1], [0], [0], [1], [0, 0, 1, 1], [], []>} : vector<32x32xf32>, vector<32x128xf32>, vector<32x128xf32> -> vector<32x128xf32>
    %c32_8 = arith.constant 32 : index
    %c32_9 = arith.constant 32 : index
    %10 = vector.load %arg1[%c32_8, %c32_9] : memref<72x33xf32, #tpu.memory_space<vmem>>, vector<32x1xf32>
    %11 = vector.broadcast %10 : vector<32x1xf32> to vector<32x128xf32>
    %12 = arith.addf %9, %11 : vector<32x128xf32>
    %cst_10 = arith.constant 0.000000e+00 : f32
    %13 = vector.broadcast %cst_10 : f32 to vector<32x128xf32>
    %14 = arith.maximumf %12, %13 : vector<32x128xf32>
    %c64 = arith.constant 64 : index
    %c0_11 = arith.constant 0 : index
    %15 = vector.load %arg1[%c64, %c0_11] : memref<72x33xf32, #tpu.memory_space<vmem>>, vector<8x32xf32>
    %cst_12 = arith.constant dense<0.000000e+00> : vector<8x128xf32>
    %16 = tpu.matmul %15, %14, %cst_12 {dimension_numbers = #tpu.dot_dimension_numbers<[1], [0], [0], [1], [0, 0, 1, 1], [], []>} : vector<8x32xf32>, vector<32x128xf32>, vector<8x128xf32> -> vector<8x128xf32>
    %c64_13 = arith.constant 64 : index
    %c32_14 = arith.constant 32 : index
    %17 = vector.load %arg1[%c64_13, %c32_14] : memref<72x33xf32, #tpu.memory_space<vmem>>, vector<8x1xf32>
    %18 = vector.broadcast %17 : vector<8x1xf32> to vector<8x128xf32>
    %19 = arith.addf %16, %18 : vector<8x128xf32>
    %c0_15 = arith.constant 0 : index
    %c0_16 = arith.constant 0 : index
    %20 = vector.load %arg3[%c0_15, %c0_16] : memref<8x128xf32, #tpu.memory_space<vmem>>, vector<8x128xf32>
    tpu.vector_store %arg3[%c0_15, %c0_16], %19 {strides = array<i32>} : memref<8x128xf32, #tpu.memory_space<vmem>>, vector<8x128xf32>,
    return
  }
  func.func @transform_0(%arg0: i32) -> (i32, i32) {
    %c0_i32 = arith.constant 0 : i32
    %c0_i32_0 = arith.constant 0 : i32
    %c0_i32_1 = arith.constant 0 : i32
    return %c0_i32, %c0_i32_0 : i32, i32
  }
  func.func @transform_1(%arg0: i32) -> (i32, i32) {
    %c0_i32 = arith.constant 0 : i32
    %c0_i32_0 = arith.constant 0 : i32
    return %c0_i32, %arg0 : i32, i32
  }
  func.func @transform_2(%arg0: i32) -> (i32, i32) {
    %c0_i32 = arith.constant 0 : i32
    %c0_i32_0 = arith.constant 0 : i32
    return %c0_i32, %arg0 : i32, i32
  }
}

</mosaic_0001>

<llo_original>
// kernel: mlp_forward_fb.1
$region0: #{mlp_forward_fb.1}
  #allocation0 [shape = 'u32[]', space=smem, size = 0x4, offset = 0x4, fixed_abs, tag = 'smem constant byte address 0x4 - core index']
  #allocation1 [shape = 'u32[144,128]{1,0:T(1,128)}', space=vmem, size = 0x12000, scoped, tag = 'internal scratch']
  %s0 = inlined_call_operand.vmem [shape: f32[72,33], index: 0, kind: input, shape index: {}]
  %s1 = inlined_call_operand.vmem [shape: f32[8,128], index: 1, kind: input, shape index: {}]
  %s2 = inlined_call_operand.hbm [shape: f32[8,128], index: 2, kind: output, shape index: {}]
  %s3 = sld [smem:[#allocation0]]
  $region18: #{mlp_forward_fb.1} parent=0
    _
  %s5 = ssub.s32 1, %s3
  %s6 = scalar_select 0, %s5, %s3
  $region1: #{mlp_forward_fb.1} parent=0
    #allocation2 [shape = 'u8[4096]{0}', space=vmem, size = 0x1000, scoped, tag = 'output window, operand 0, single buffered']
    #allocation3 [shape = 's32[1]{0}', space=sflag, size = 0x4, scoped, tag = 'scoped memory for mlp_forward_fb.1']
    %7 = vsyncpa [#allocation3], 0
    // Predicated region
    $region2: #{mlp_forward_fb.1} parent=1 // pred_check
      _
    $region3: #{mlp_forward_fb.1} parent=1 // pred_check_branch
      %9 = sbr.rel (0) target = $region5
    $region4: #{mlp_forward_fb.1} parent=1 // pred_region
      _
    $region5: #{mlp_forward_fb.1} parent=1 // pred_fallthru
      _
    // Predicated region
    $region6: #{mlp_forward_fb.1} parent=1 // pred_check
      _
    $region7: #{mlp_forward_fb.1} parent=1 // pred_check_branch
      %11 = sbr.rel (0) target = $region9
    $region8: #{mlp_forward_fb.1} parent=1 // pred_region
      _
    $region9: #{mlp_forward_fb.1} parent=1 // pred_fallthru
      _
    %v12 = vld [vmem:[%s1] sm:$0xff]
    %v13 = vld [vmem:[%s0] sm:$0xff]
    %v14 = vld [vmem:[%s0 + $0x8] sm:$0xff]
    %v15 = vld [vmem:[%s0 + $0x10] sm:$0xff]
    %v16 = vld [vmem:[%s0 + $0x18] sm:$0xff]
    %18 = vset.pattern.permute.xlu0 32
    %19 = vperm.xlu0 %18, %v13
    %v20 = vpop.permute.xlu0 %19
    %23 = vset.pattern.permute.xlu0 32
    %24 = vperm.xlu0 %23, %v14
    %v25 = vpop.permute.xlu0 %24
    %28 = vset.pattern.permute.xlu0 32
    %29 = vperm.xlu0 %28, %v15
    %v30 = vpop.permute.xlu0 %29
    %33 = vset.pattern.permute.xlu0 32
    %34 = vperm.xlu0 %33, %v16
    %v35 = vpop.permute.xlu0 %34
    %vm37 = vcmask 64512
    %v38 = vsel %vm37, %v13, 0
    %v40 = vsel %vm37, %v14, 0
    %v42 = vsel %vm37, %v15, 0
    %v44 = vsel %vm37, %v16, 0
    %46 = vmatprep.subr.mxu0 0.0
    %47 = vmatpush1.msra.mxu0 0.0
    %48 = vmatprep.subr.mxu0 0.0
    %49 = vmatpush1.msra.mxu0 0.0
    %50 = vmatprep.subr.mxu0 0.0
    %51 = vmatpush1.msra.mxu0 0.0
    %52 = vmatprep.subr.mxu0 0.0
    %53 = vmatpush1.msra.mxu0 0.0
    %54 = vmatprep.subr.mxu0 0.0
    %55 = vmatpush1.msra.mxu0 0.0
    %56 = vmatprep.subr.mxu0 0.0
    %57 = vmatpush1.msra.mxu0 0.0
    %58 = vmatprep.subr.mxu0 0.0
    %59 = vmatpush1.msra.mxu0 0.0
    %60 = vmatprep.subr.mxu0 0.0
    %61 = vmatpush1.msra.mxu0 0.0
    %62 = vmatprep.subr.mxu0 0.0
    %63 = vmatpush1.msra.mxu0 0.0
    %64 = vmatprep.subr.mxu0 0.0
    %65 = vmatpush1.msra.mxu0 0.0
    %66 = vmatprep.subr.mxu0 0.0
    %67 = vmatpush1.msra.mxu0 0.0
    %68 = vmatprep.subr.mxu0 0.0
    %69 = vmatpush1.msra.mxu0 0.0
    %70 = vmatprep.subr.mxu0 0.0
    %71 = vmatpush1.msra.mxu0 0.0
    %72 = vmatprep.subr.mxu0 0.0
    %73 = vmatpush1.msra.mxu0 0.0
    %74 = vmatprep.subr.mxu0 0.0
    %75 = vmatpush1.msra.mxu0 0.0
    %76 = vmatprep.subr.mxu0 0.0
    %77 = vmatpush1.msra.mxu0 %v12
    %78 = vmatprep.subr.mxu0 0.0
    %79 = vmatpush2.msra.mxu0 0.0
    %80 = vmatprep.subr.mxu0 0.0
    %81 = vmatpush2.msra.mxu0 0.0
    %82 = vmatprep.subr.mxu0 0.0
    %83 = vmatpush2.msra.mxu0 0.0
    %84 = vmatprep.subr.mxu0 0.0
    %85 = vmatpush2.msra.mxu0 0.0
    %86 = vmatprep.subr.mxu0 0.0
    %87 = vmatpush2.msra.mxu0 0.0
    %88 = vmatprep.subr.mxu0 0.0
    %89 = vmatpush2.msra.mxu0 0.0
    %90 = vmatprep.subr.mxu0 0.0
    %91 = vmatpush2.msra.mxu0 0.0
    %92 = vmatprep.subr.mxu0 0.0
    %93 = vmatpush2.msra.mxu0 0.0
    %94 = vmatprep.subr.mxu0 0.0
    %95 = vmatpush2.msra.mxu0 0.0
    %96 = vmatprep.subr.mxu0 0.0
    %97 = vmatpush2.msra.mxu0 0.0
    %98 = vmatprep.subr.mxu0 0.0
    %99 = vmatpush2.msra.mxu0 0.0
    %100 = vmatprep.subr.mxu0 0.0
    %101 = vmatpush2.msra.mxu0 0.0
    %102 = vmatprep.subr.mxu0 0.0
    %103 = vmatpush2.msra.mxu0 0.0
    %104 = vmatprep.subr.mxu0 0.0
    %105 = vmatpush2.msra.mxu0 0.0
    %106 = vmatprep.subr.mxu0 0.0
    %107 = vmatpush2.msra.mxu0 0.0
    %108 = vmatprep.subr.mxu0 0.0
    %109 = vmatpush2.msra.mxu0 0.0
    %110 = vmatprep.mubr.f32.mxu0 0.0
    %111 = vmatmul.mubr.f32.gmra.mxu0 %v38
    %v112 = vpop.f32.mrf.mxu0
    %v113 = vadd.f32 %v20, %v112
    %v114 = vpop.f32.mrf.mxu0
    %115 = vmatprep.mubr.f32.mxu0 0.0
    %116 = vmatmul.mubr.f32.gmra.mxu0 %v40
    %v117 = vpop.f32.mrf.mxu0
    %v118 = vadd.f32 %v25, %v117
    %v119 = vpop.f32.mrf.mxu0
    %120 = vmatprep.mubr.f32.mxu0 0.0
    %121 = vmatmul.mubr.f32.gmra.mxu0 %v42
    %v122 = vpop.f32.mrf.mxu0
    %v123 = vadd.f32 %v30, %v122
    %v124 = vpop.f32.mrf.mxu0
    %125 = vmatprep.mubr.f32.mxu0 0.0
    %126 = vmatmul.mubr.f32.gmra.mxu0 %v44
    %v127 = vpop.f32.mrf.mxu0
    %v128 = vadd.f32 %v35, %v127
    %v129 = vpop.f32.mrf.mxu0
    %130 = vdwg.mxu0
    %v131 = vmax.f32 %v113, 0.0
    %v132 = vmax.f32 %v118, 0.0
    %v133 = vmax.f32 %v123, 0.0
    %v134 = vmax.f32 %v128, 0.0
    %v135 = vld [vmem:[%s0 + $0x20] sm:$0xff]
    %v136 = vld [vmem:[%s0 + $0x28] sm:$0xff]
    %v137 = vld [vmem:[%s0 + $0x30] sm:$0xff]
    %v138 = vld [vmem:[%s0 + $0x38] sm:$0xff]
    %140 = vset.pattern.permute.xlu0 32
    %141 = vperm.xlu0 %140, %v135
    %v142 = vpop.permute.xlu0 %141
    %145 = vset.pattern.permute.xlu0 32
    %146 = vperm.xlu0 %145, %v136
    %v147 = vpop.permute.xlu0 %146
    %150 = vset.pattern.permute.xlu0 32
    %151 = vperm.xlu0 %150, %v137
    %v152 = vpop.permute.xlu0 %151
    %155 = vset.pattern.permute.xlu0 32
    %156 = vperm.xlu0 %155, %v138
    %v157 = vpop.permute.xlu0 %156
    %vm159 = vcmask 261120
    %v160 = vsel %vm159, %v135, 0
    %v162 = vsel %vm159, %v136, 0
    %v164 = vsel %vm159, %v137, 0
    %v166 = vsel %vm159, %v138, 0
    %168 = vmatprep.subr.mxu0 0.0
    %169 = vmatpush1.msra.mxu0 0.0
    %170 = vmatprep.subr.mxu0 0.0
    %171 = vmatpush1.msra.mxu0 0.0
    %172 = vmatprep.subr.mxu0 0.0
    %173 = vmatpush1.msra.mxu0 0.0
    %174 = vmatprep.subr.mxu0 0.0
    %175 = vmatpush1.msra.mxu0 0.0
    %176 = vmatprep.subr.mxu0 0.0
    %177 = vmatpush1.msra.mxu0 0.0
    %178 = vmatprep.subr.mxu0 0.0
    %179 = vmatpush1.msra.mxu0 0.0
    %180 = vmatprep.subr.mxu0 0.0
    %181 = vmatpush1.msra.mxu0 0.0
    %182 = vmatprep.subr.mxu0 0.0
    %183 = vmatpush1.msra.mxu0 0.0
    %184 = vmatprep.subr.mxu0 0.0
    %185 = vmatpush1.msra.mxu0 0.0
    %186 = vmatprep.subr.mxu0 0.0
    %187 = vmatpush1.msra.mxu0 0.0
    %188 = vmatprep.subr.mxu0 0.0
    %189 = vmatpush1.msra.mxu0 0.0
    %190 = vmatprep.subr.mxu0 0.0
    %191 = vmatpush1.msra.mxu0 0.0
    %192 = vmatprep.subr.mxu0 0.0
    %193 = vmatpush1.msra.mxu0 %v134
    %194 = vmatprep.subr.mxu0 0.0
    %195 = vmatpush1.msra.mxu0 %v133
    %196 = vmatprep.subr.mxu0 0.0
    %197 = vmatpush1.msra.mxu0 %v132
    %198 = vmatprep.subr.mxu0 0.0
    %199 = vmatpush1.msra.mxu0 %v131
    %200 = vmatprep.subr.mxu0 0.0
    %201 = vmatpush2.msra.mxu0 0.0
    %202 = vmatprep.subr.mxu0 0.0
    %203 = vmatpush2.msra.mxu0 0.0
    %204 = vmatprep.subr.mxu0 0.0
    %205 = vmatpush2.msra.mxu0 0.0
    %206 = vmatprep.subr.mxu0 0.0
    %207 = vmatpush2.msra.mxu0 0.0
    %208 = vmatprep.subr.mxu0 0.0
    %209 = vmatpush2.msra.mxu0 0.0
    %210 = vmatprep.subr.mxu0 0.0
    %211 = vmatpush2.msra.mxu0 0.0
    %212 = vmatprep.subr.mxu0 0.0
    %213 = vmatpush2.msra.mxu0 0.0
    %214 = vmatprep.subr.mxu0 0.0
    %215 = vmatpush2.msra.mxu0 0.0
    %216 = vmatprep.subr.mxu0 0.0
    %217 = vmatpush2.msra.mxu0 0.0
    %218 = vmatprep.subr.mxu0 0.0
    %219 = vmatpush2.msra.mxu0 0.0
    %220 = vmatprep.subr.mxu0 0.0
    %221 = vmatpush2.msra.mxu0 0.0
    %222 = vmatprep.subr.mxu0 0.0
    %223 = vmatpush2.msra.mxu0 0.0
    %224 = vmatprep.subr.mxu0 0.0
    %225 = vmatpush2.msra.mxu0 0.0
    %226 = vmatprep.subr.mxu0 0.0
    %227 = vmatpush2.msra.mxu0 0.0
    %228 = vmatprep.subr.mxu0 0.0
    %229 = vmatpush2.msra.mxu0 0.0
    %230 = vmatprep.subr.mxu0 0.0
    %231 = vmatpush2.msra.mxu0 0.0
    %232 = vmatprep.mubr.f32.mxu0 0.0
    %233 = vmatmul.mubr.f32.gmra.mxu0 %v160
    %v234 = vpop.f32.mrf.mxu0
    %v235 = vadd.f32 %v142, %v234
    %v236 = vpop.f32.mrf.mxu0
    %237 = vmatprep.mubr.f32.mxu0 0.0
    %238 = vmatmul.mubr.f32.gmra.mxu0 %v162
    %v239 = vpop.f32.mrf.mxu0
    %v240 = vadd.f32 %v147, %v239
    %v241 = vpop.f32.mrf.mxu0
    %242 = vmatprep.mubr.f32.mxu0 0.0
    %243 = vmatmul.mubr.f32.gmra.mxu0 %v164
    %v244 = vpop.f32.mrf.mxu0
    %v245 = vadd.f32 %v152, %v244
    %v246 = vpop.f32.mrf.mxu0
    %247 = vmatprep.mubr.f32.mxu0 0.0
    %248 = vmatmul.mubr.f32.gmra.mxu0 %v166
    %v249 = vpop.f32.mrf.mxu0
    %v250 = vadd.f32 %v157, %v249
    %v251 = vpop.f32.mrf.mxu0
    %252 = vdwg.mxu0
    %v253 = vmax.f32 %v235, 0.0
    %v254 = vmax.f32 %v240, 0.0
    %v255 = vmax.f32 %v245, 0.0
    %v256 = vmax.f32 %v250, 0.0
    %v257 = vld [vmem:[%s0 + $0x40] sm:$0xff]
    %259 = vset.pattern.permute.xlu0 32
    %260 = vperm.xlu0 %259, %v257
    %v261 = vpop.permute.xlu0 %260
    %v263 = vsel %vm159, %v257, 0
    %265 = vmatprep.subr.mxu0 0.0
    %266 = vmatpush1.msra.mxu0 0.0
    %267 = vmatprep.subr.mxu0 0.0
    %268 = vmatpush1.msra.mxu0 0.0
    %269 = vmatprep.subr.mxu0 0.0
    %270 = vmatpush1.msra.mxu0 0.0
    %271 = vmatprep.subr.mxu0 0.0
    %272 = vmatpush1.msra.mxu0 0.0
    %273 = vmatprep.subr.mxu0 0.0
    %274 = vmatpush1.msra.mxu0 0.0
    %275 = vmatprep.subr.mxu0 0.0
    %276 = vmatpush1.msra.mxu0 0.0
    %277 = vmatprep.subr.mxu0 0.0
    %278 = vmatpush1.msra.mxu0 0.0
    %279 = vmatprep.subr.mxu0 0.0
    %280 = vmatpush1.msra.mxu0 0.0
    %281 = vmatprep.subr.mxu0 0.0
    %282 = vmatpush1.msra.mxu0 0.0
    %283 = vmatprep.subr.mxu0 0.0
    %284 = vmatpush1.msra.mxu0 0.0
    %285 = vmatprep.subr.mxu0 0.0
    %286 = vmatpush1.msra.mxu0 0.0
    %287 = vmatprep.subr.mxu0 0.0
    %288 = vmatpush1.msra.mxu0 0.0
    %289 = vmatprep.subr.mxu0 0.0
    %290 = vmatpush1.msra.mxu0 %v256
    %291 = vmatprep.subr.mxu0 0.0
    %292 = vmatpush1.msra.mxu0 %v255
    %293 = vmatprep.subr.mxu0 0.0
    %294 = vmatpush1.msra.mxu0 %v254
    %295 = vmatprep.subr.mxu0 0.0
    %296 = vmatpush1.msra.mxu0 %v253
    %297 = vmatprep.subr.mxu0 0.0
    %298 = vmatpush2.msra.mxu0 0.0
    %299 = vmatprep.subr.mxu0 0.0
    %300 = vmatpush2.msra.mxu0 0.0
    %301 = vmatprep.subr.mxu0 0.0
    %302 = vmatpush2.msra.mxu0 0.0
    %303 = vmatprep.subr.mxu0 0.0
    %304 = vmatpush2.msra.mxu0 0.0
    %305 = vmatprep.subr.mxu0 0.0
    %306 = vmatpush2.msra.mxu0 0.0
    %307 = vmatprep.subr.mxu0 0.0
    %308 = vmatpush2.msra.mxu0 0.0
    %309 = vmatprep.subr.mxu0 0.0
    %310 = vmatpush2.msra.mxu0 0.0
    %311 = vmatprep.subr.mxu0 0.0
    %312 = vmatpush2.msra.mxu0 0.0
    %313 = vmatprep.subr.mxu0 0.0
    %314 = vmatpush2.msra.mxu0 0.0
    %315 = vmatprep.subr.mxu0 0.0
    %316 = vmatpush2.msra.mxu0 0.0
    %317 = vmatprep.subr.mxu0 0.0
    %318 = vmatpush2.msra.mxu0 0.0
    %319 = vmatprep.subr.mxu0 0.0
    %320 = vmatpush2.msra.mxu0 0.0
    %321 = vmatprep.subr.mxu0 0.0
    %322 = vmatpush2.msra.mxu0 0.0
    %323 = vmatprep.subr.mxu0 0.0
    %324 = vmatpush2.msra.mxu0 0.0
    %325 = vmatprep.subr.mxu0 0.0
    %326 = vmatpush2.msra.mxu0 0.0
    %327 = vmatprep.subr.mxu0 0.0
    %328 = vmatpush2.msra.mxu0 0.0
    %329 = vmatprep.mubr.f32.mxu0 0.0
    %330 = vmatmul.mubr.f32.gmra.mxu0 %v263
    %v331 = vpop.f32.mrf.mxu0
    %v332 = vadd.f32 %v261, %v331
    %v333 = vpop.f32.mrf.mxu0
    %334 = vdwg.mxu0
    %335 = vst [vmem:[#allocation2] sm:$0xff] %v332
    // Predicated region
    $region10: #{mlp_forward_fb.1} parent=1 // pred_check
      _
    $region11: #{mlp_forward_fb.1} parent=1 // pred_check_branch
      %337 = sbr.rel (0) target = $region13
    $region12: #{mlp_forward_fb.1} parent=1 // pred_region
      %s339 = ssub.s32 128, 128
      %340 = vsyncadd [#allocation3], %s339
      %s342 = sshll.u32 [#allocation2], 4
      %s343 = int_to_ptr.vmem [resolvable:$true] %s342
      %345 = dma.vmem_to_hbm [thread:$0]  %s343, 128, %s2, [#allocation3]
    $region13: #{mlp_forward_fb.1} parent=1 // pred_fallthru
      _
    // Predicated region
    $region14: #{mlp_forward_fb.1} parent=1 // pred_check
      _
    $region15: #{mlp_forward_fb.1} parent=1 // pred_check_branch
      %347 = sbr.rel (0) target = $region17
    $region16: #{mlp_forward_fb.1} parent=1 // pred_region
      %348 = dma.done [#allocation3], 128
    $region17: #{mlp_forward_fb.1} parent=1 // pred_fallthru
      _
    %349 = vsyncpa [#allocation3], 1

</llo_original>
